<compile_context>
chip_gen: v6e
topology: v6e:2x2x1
jax: 0.10.0
libtpu: 0.0.40
codegen_flags: <defaults>
</compile_context>

<pallas_src>
import functools

import jax
import jax.numpy as jnp
from jax import lax
from jax.experimental import pallas as pl
from jax.experimental.pallas import tpu as pltpu


def _round_up(x, m):
    return ((x + m - 1) // m) * m


def _accuracy_kernel(logits_ref, labels_ref, corr_ref, valid_ref, *scratch,
                     ignore_index, num_classes, class_tile, num_class_steps):
    # Grid = (row_shards [parallel], row_steps [arbitrary], class_steps [arbitrary]).
    ri = pl.program_id(1)
    ci = pl.program_id(2)

    # Zero the resident per-shard output blocks once.
    @pl.when(jnp.logical_and(ri == 0, ci == 0))
    def _():
        corr_ref[...] = jnp.zeros_like(corr_ref)
        valid_ref[...] = jnp.zeros_like(valid_ref)

    x = logits_ref[...]                                   # (tn, tc), native dtype
    tn, tc = x.shape
    col = lax.broadcasted_iota(jnp.int32, (tn, tc), 1)

    if num_classes % class_tile != 0:
        # Mask lanes past the real class count in the (partial) last class block.
        neg_inf = jnp.asarray(-jnp.inf, dtype=x.dtype)
        x = jnp.where(ci * class_tile + col < num_classes, x, neg_inf)

    # First-occurrence argmax within this class tile (native-dtype compares give
    # the same order as the reference's float() cast).
    tile_max = jnp.max(x, axis=-1, keepdims=True)                     # (tn, 1)
    tile_pred = jnp.min(jnp.where(x == tile_max, col, tc),
                        axis=-1, keepdims=True)                       # (tn, 1)

    if num_class_steps == 1:
        pred = tile_pred
    else:
        m_ref, idx_ref = scratch                                      # (tn,1) f32 / i32

        @pl.when(ci == 0)
        def _():
            m_ref[...] = jnp.full(m_ref.shape, -jnp.inf, dtype=m_ref.dtype)

        tile_max_f32 = tile_max.astype(jnp.float32)
        # Strictly-greater keeps the earliest (lowest-index) class tile on ties,
        # preserving first-occurrence semantics across tiles.
        take = jnp.logical_or(tile_max_f32 > m_ref[...], ci == 0)
        idx_ref[...] = jnp.where(take, tile_pred + ci * class_tile, idx_ref[...])
        m_ref[...] = jnp.maximum(m_ref[...], tile_max_f32)
        pred = idx_ref[...]

    @pl.when(ci == num_class_steps - 1)
    def _():
        labels = labels_ref[...]                                      # (tn, 1) int32
        valid = labels != ignore_index
        correct = jnp.logical_and(pred == labels, valid)
        # Scalar counts broadcast into the lane-dense (1, 8, 128) output blocks.
        corr_ref[...] += jnp.sum(correct.astype(jnp.int32))
        valid_ref[...] += jnp.sum(valid.astype(jnp.int32))


def _chip_defaults():
    """Per-generation VMEM budget / limit and row-shard count."""
    try:
        vmem_cap = int(pltpu.get_tpu_info().vmem_capacity_bytes)
    except Exception:
        vmem_cap = 128 * 1024 * 1024
    if vmem_cap <= 96 * 1024 * 1024:
        # v7x-like: 64 MiB VMEM per TensorCore, 2 TCs per chip.
        return 24 << 20, 48 << 20, 2
    # v5e / v6e: 128 MiB VMEM, single TensorCore.
    return 56 << 20, 96 << 20, 1


def pallas_accuracy(logits, labels, ignore_index=-1, *,
                    vmem_budget_bytes=None, num_row_shards=None,
                    max_class_tile=2048):
    """logits: float array [..., C]; labels: int array [...] (same leading dims)."""
    c = logits.shape[-1]
    logits2d = logits.reshape(-1, c)
    labels2d = labels.reshape(-1, 1).astype(jnp.int32)
    n = logits2d.shape[0]

    default_budget, vmem_limit, default_shards = _chip_defaults()
    if vmem_budget_bytes is None:
        vmem_budget_bytes = default_budget
    if num_row_shards is None:
        num_row_shards = default_shards
    p = max(1, int(num_row_shards))

    itemsize = jnp.dtype(logits2d.dtype).itemsize
    sub = 8 * max(1, 4 // itemsize)          # sublane packing: 8 f32 / 16 bf16 / 32 i8

    # Class-axis tiling (large-vocab path); single step for moderate C.
    if c <= max_class_tile:
        tc, class_steps = c, 1
    else:
        tc = max_class_tile                  # multiple of 128
        class_steps = pl.cdiv(c, tc)

    # VMEM-budgeted row tile with lane-padded, dtype-aware accounting.
    lane_c = _round_up(tc, 128)              # class lanes as actually laid out
    widen = 1 if itemsize < 4 else 0         # f32 widening of bf16 temps (v5e VALU)
    per_row = (2 * lane_c * itemsize         # logits block, double buffered
               + (3 + widen) * lane_c * 4    # int32/f32 argmax temporaries
               + 2 * 512)                    # (tn,1) int32 labels block, lane padded x2
    if class_steps > 1:
        per_row += 2 * 512                   # (tn,1) running max / argidx scratch

    tn_cap = max(sub, (vmem_budget_bytes // per_row) // sub * sub)
    tn = min(tn_cap, _round_up(max(n, 1), sub))
    row_steps = max(1, pl.cdiv(n, p * tn))
    tn = _round_up(max(pl.cdiv(n, p * row_steps), 1), sub)   # minimize row padding
    n_pad = p * row_steps * tn
    nb_valid = max(1, pl.cdiv(n, tn))        # row blocks that contain real rows

    # Only the tiny labels array is padded (with ignore_index); the logits tensor
    # is streamed unpadded, with out-of-range row blocks clamped onto the last
    # real block and masked out by the padded labels.
    if n_pad != n:
        labels2d = jnp.pad(labels2d, ((0, n_pad - n), (0, 0)),
                           constant_values=ignore_index)

    def logits_map(pi, ri, ci):
        rb = pi * row_steps + ri
        return (jnp.minimum(rb, nb_valid - 1), ci)

    def labels_map(pi, ri, ci):
        return (pi * row_steps + ri, 0)

    scratch_shapes = []
    if class_steps > 1:
        scratch_shapes = [pltpu.VMEM((tn, 1), jnp.float32),   # running max
                          pltpu.VMEM((tn, 1), jnp.int32)]     # running argmax

    kernel = functools.partial(_accuracy_kernel, ignore_index=ignore_index,
                               num_classes=c, class_tile=tc,
                               num_class_steps=class_steps)

    corr, valid = pl.pallas_call(
        kernel,
        out_shape=(jax.ShapeDtypeStruct((p, 8, 128), jnp.int32),
                   jax.ShapeDtypeStruct((p, 8, 128), jnp.int32)),
        grid_spec=pltpu.PrefetchScalarGridSpec(
            num_scalar_prefetch=0,
            grid=(p, row_steps, class_steps),
            in_specs=[
                pl.BlockSpec((tn, tc), logits_map),
                pl.BlockSpec((tn, 1), labels_map),
            ],
            out_specs=[
                pl.BlockSpec((1, 8, 128), lambda pi, ri, ci: (pi, 0, 0)),
                pl.BlockSpec((1, 8, 128), lambda pi, ri, ci: (pi, 0, 0)),
            ],
            scratch_shapes=scratch_shapes,
        ),
        compiler_params=pltpu.CompilerParams(
            dimension_semantics=("parallel", "arbitrary", "arbitrary"),
            vmem_limit_bytes=vmem_limit,
        ),
    )(logits2d, labels2d)

    corr_total = jnp.sum(corr[:, 0, 0]).astype(jnp.float32)
    valid_total = jnp.sum(valid[:, 0, 0]).astype(jnp.float32)
    # NOTE: like the reference, returns NaN when no label is valid.
    return corr_total / valid_total


class Accuracy:
    """Drop-in equivalent of the PyTorch Accuracy module's forward."""

    def __init__(self, ignore_index=-1):
        self.ignore_index = ignore_index

    def __call__(self, inputs, target):
        return pallas_accuracy(inputs, target, self.ignore_index)


def reference_accuracy(logits, labels, ignore_index=-1):
    valid_mask = labels != ignore_index
    predictions = jnp.argmax(logits.astype(jnp.float32), axis=-1)
    correct = (predictions == labels) & valid_mask
    return correct.sum().astype(jnp.float32) / valid_mask.sum().astype(jnp.float32)


if __name__ == "__main__":
    key = jax.random.PRNGKey(0)
    keys = jax.random.split(key, 9)

    # Case 1: small token-classification-like shapes, f32 logits, chip defaults.
    batch, seq, num_classes = 2, 8, 32
    logits = jax.random.normal(keys[0], (batch, seq, num_classes), dtype=jnp.float32)
    labels = jax.random.randint(keys[1], (batch, seq), 0, num_classes, dtype=jnp.int32)
    labels = jnp.where(jax.random.bernoulli(keys[2], 0.25, (batch, seq)), -1, labels)
    acc_mod = Accuracy(ignore_index=-1)
    acc = jax.block_until_ready(acc_mod(logits, labels))
    ref = reference_accuracy(logits, labels, ignore_index=-1)
    assert jnp.allclose(acc, ref, atol=1e-6), (acc, ref)

    # Case 2: odd shapes, bf16 logits, tiny VMEM budget and forced 2 row shards
    # (exercises multi-step rows, trailing partial blocks, block-index clamping
    # and the labels-only padding path).
    b2, s2, c2 = 3, 50, 17
    logits2 = jax.random.normal(keys[3], (b2, s2, c2), dtype=jnp.bfloat16)
    labels2 = jax.random.randint(keys[4], (b2, s2), 0, c2, dtype=jnp.int32)
    labels2 = jnp.where(jax.random.bernoulli(keys[5], 0.3, (b2, s2)), -1, labels2)
    acc2 = jax.block_until_ready(
        pallas_accuracy(logits2, labels2, ignore_index=-1,
                        vmem_budget_bytes=64 * 1024, num_row_shards=2))
    ref2 = reference_accuracy(logits2, labels2, ignore_index=-1)
    assert jnp.allclose(acc2, ref2, atol=1e-6), (acc2, ref2)

    # Case 3: class-axis tiling path (C > max_class_tile, partial last class block).
    n3, c3 = 64, 2304
    logits3 = jax.random.normal(keys[6], (n3, c3), dtype=jnp.float32)
    labels3 = jax.random.randint(keys[7], (n3,), 0, c3, dtype=jnp.int32)
    labels3 = jnp.where(jax.random.bernoulli(keys[8], 0.2, (n3,)), -1, labels3)
    acc3 = jax.block_until_ready(
        pallas_accuracy(logits3, labels3, ignore_index=-1, max_class_tile=2048))
    ref3 = reference_accuracy(logits3, labels3, ignore_index=-1)
    assert jnp.allclose(acc3, ref3, atol=1e-6), (acc3, ref3)

    print("KERNEL_OK")
</pallas_src>

<mosaic_0001>
module attributes {stable_mosaic.version = 11 : i64} {
  func.func @_accuracy_kernel(%arg0: i32, %arg1: i32, %arg2: i32, %arg3: memref<16x32xf32, #tpu.memory_space<vmem>>, %arg4: memref<16x1xi32, #tpu.memory_space<vmem>>, %arg5: memref<1x8x128xi32, #tpu.memory_space<vmem>>, %arg6: memref<1x8x128xi32, #tpu.memory_space<vmem>>) attributes {dimension_semantics = [#tpu.dimension_semantics<parallel>, #tpu.dimension_semantics<arbitrary>, #tpu.dimension_semantics<arbitrary>], iteration_bounds = array<i64: 1, 1, 1>, scalar_prefetch = 0 : i64, scratch_operands = 0 : i64, tpu.core_type = #tpu.core_type<tc>, window_params = [{transform_indices = @transform_0, window_bounds = array<i64: 16, 32>}, {transform_indices = @transform_1, window_bounds = array<i64: 16, 1>}, {transform_indices = @transform_2, window_bounds = array<i64: 1, 8, 128>}, {transform_indices = @transform_3, window_bounds = array<i64: 1, 8, 128>}]} {
    %c0_i32 = arith.constant 0 : i32
    %0 = arith.cmpi eq, %arg1, %c0_i32 : i32
    %c0_i32_0 = arith.constant 0 : i32
    %1 = arith.cmpi eq, %arg2, %c0_i32_0 : i32
    %2 = arith.andi %0, %1 : i1
    %3 = arith.extui %2 : i1 to i32
    %c0_i32_1 = arith.constant 0 : i32
    %4 = arith.cmpi ne, %3, %c0_i32_1 : i32
    scf.if %4 {
      %c0_i32_6 = arith.constant 0 : i32
      %18 = vector.broadcast %c0_i32_6 : i32 to vector<1x8x128xi32>
      %c0_7 = arith.constant 0 : index
      %c0_8 = arith.constant 0 : index
      %c0_9 = arith.constant 0 : index
      %19 = vector.load %arg5[%c0_7, %c0_8, %c0_9] : memref<1x8x128xi32, #tpu.memory_space<vmem>>, vector<1x8x128xi32>
      tpu.vector_store %arg5[%c0_7, %c0_8, %c0_9], %18 {strides = array<i32>} : memref<1x8x128xi32, #tpu.memory_space<vmem>>, vector<1x8x128xi32>,
      %c0_i32_10 = arith.constant 0 : i32
      %20 = vector.broadcast %c0_i32_10 : i32 to vector<1x8x128xi32>
      %c0_11 = arith.constant 0 : index
      %c0_12 = arith.constant 0 : index
      %c0_13 = arith.constant 0 : index
      %21 = vector.load %arg6[%c0_11, %c0_12, %c0_13] : memref<1x8x128xi32, #tpu.memory_space<vmem>>, vector<1x8x128xi32>
      tpu.vector_store %arg6[%c0_11, %c0_12, %c0_13], %20 {strides = array<i32>} : memref<1x8x128xi32, #tpu.memory_space<vmem>>, vector<1x8x128xi32>,
    } else {
    }
    %c0 = arith.constant 0 : index
    %c0_2 = arith.constant 0 : index
    %5 = vector.load %arg3[%c0, %c0_2] : memref<16x32xf32, #tpu.memory_space<vmem>>, vector<16x32xf32>
    %6 = tpu.iota {dimensions = array<i32: 1>} : vector<16x32xi32>
    %cst = arith.constant dense<0xFF800000> : vector<16xf32>
    %7 = vector.multi_reduction <maximumf>, %5, %cst [1] : vector<16x32xf32> to vector<16xf32>
    %8 = vector.shape_cast %7 : vector<16xf32> to vector<16x1xf32>
    %9 = vector.broadcast %8 : vector<16x1xf32> to vector<16x32xf32>
    %10 = arith.cmpf oeq, %5, %9 : vector<16x32xf32>
    %c32_i32 = arith.constant 32 : i32
    %11 = vector.broadcast %c32_i32 : i32 to vector<16x32xi32>
    %12 = arith.select %10, %6, %11 : vector<16x32xi1>, vector<16x32xi32>
    %cst_3 = arith.constant dense<2147483647> : vector<16xi32>
    %13 = vector.multi_reduction <minsi>, %12, %cst_3 [1] : vector<16x32xi32> to vector<16xi32>
    %14 = vector.shape_cast %13 : vector<16xi32> to vector<16x1xi32>
    %c0_i32_4 = arith.constant 0 : i32
    %15 = arith.cmpi eq, %arg2, %c0_i32_4 : i32
    %16 = arith.extui %15 : i1 to i32
    %c0_i32_5 = arith.constant 0 : i32
    %17 = arith.cmpi ne, %16, %c0_i32_5 : i32
    scf.if %17 {
      %c0_6 = arith.constant 0 : index
      %c0_7 = arith.constant 0 : index
      %18 = vector.load %arg4[%c0_6, %c0_7] : memref<16x1xi32, #tpu.memory_space<vmem>>, vector<16x1xi32>
      %c-1_i32 = arith.constant -1 : i32
      %19 = vector.broadcast %c-1_i32 : i32 to vector<16x1xi32>
      %20 = arith.cmpi ne, %18, %19 : vector<16x1xi32>
      %21 = arith.cmpi eq, %14, %18 : vector<16x1xi32>
      %22 = arith.andi %21, %20 : vector<16x1xi1>
      %c0_8 = arith.constant 0 : index
      %c0_9 = arith.constant 0 : index
      %c0_10 = arith.constant 0 : index
      %23 = vector.load %arg5[%c0_8, %c0_9, %c0_10] : memref<1x8x128xi32, #tpu.memory_space<vmem>>, vector<1x8x128xi32>
      %24 = arith.extui %22 : vector<16x1xi1> to vector<16x1xi32>
      %25 = vector.shape_cast %24 : vector<16x1xi32> to vector<1x16x1xi32>
      %cst_11 = arith.constant dense<0> : vector<1xi32>
      %26 = vector.multi_reduction <add>, %25, %cst_11 [1, 2] : vector<1x16x1xi32> to vector<1xi32>
      %27 = vector.shape_cast %26 : vector<1xi32> to vector<1x1x1xi32>
      %28 = vector.extract %27[0, 0, 0] : i32 from vector<1x1x1xi32>
      %29 = vector.broadcast %28 : i32 to vector<1x8x128xi32>
      %30 = arith.addi %23, %29 : vector<1x8x128xi32>
      %c0_12 = arith.constant 0 : index
      %c0_13 = arith.constant 0 : index
      %c0_14 = arith.constant 0 : index
      %31 = vector.load %arg5[%c0_12, %c0_13, %c0_14] : memref<1x8x128xi32, #tpu.memory_space<vmem>>, vector<1x8x128xi32>
      tpu.vector_store %arg5[%c0_12, %c0_13, %c0_14], %30 {strides = array<i32>} : memref<1x8x128xi32, #tpu.memory_space<vmem>>, vector<1x8x128xi32>,
      %c0_15 = arith.constant 0 : index
      %c0_16 = arith.constant 0 : index
      %c0_17 = arith.constant 0 : index
      %32 = vector.load %arg6[%c0_15, %c0_16, %c0_17] : memref<1x8x128xi32, #tpu.memory_space<vmem>>, vector<1x8x128xi32>
      %33 = arith.extui %20 : vector<16x1xi1> to vector<16x1xi32>
      %34 = vector.shape_cast %33 : vector<16x1xi32> to vector<1x16x1xi32>
      %cst_18 = arith.constant dense<0> : vector<1xi32>
      %35 = vector.multi_reduction <add>, %34, %cst_18 [1, 2] : vector<1x16x1xi32> to vector<1xi32>
      %36 = vector.shape_cast %35 : vector<1xi32> to vector<1x1x1xi32>
      %37 = vector.extract %36[0, 0, 0] : i32 from vector<1x1x1xi32>
      %38 = vector.broadcast %37 : i32 to vector<1x8x128xi32>
      %39 = arith.addi %32, %38 : vector<1x8x128xi32>
      %c0_19 = arith.constant 0 : index
      %c0_20 = arith.constant 0 : index
      %c0_21 = arith.constant 0 : index
      %40 = vector.load %arg6[%c0_19, %c0_20, %c0_21] : memref<1x8x128xi32, #tpu.memory_space<vmem>>, vector<1x8x128xi32>
      tpu.vector_store %arg6[%c0_19, %c0_20, %c0_21], %39 {strides = array<i32>} : memref<1x8x128xi32, #tpu.memory_space<vmem>>, vector<1x8x128xi32>,
    } else {
    }
    return
  }
  func.func @transform_0(%arg0: i32, %arg1: i32, %arg2: i32) -> (i32, i32) {
    %c1_i32 = arith.constant 1 : i32
    %0 = arith.muli %arg0, %c1_i32 : i32
    %1 = arith.addi %0, %arg1 : i32
    %c0_i32 = arith.constant 0 : i32
    %2 = arith.minsi %1, %c0_i32 : i32
    %c0_i32_0 = arith.constant 0 : i32
    return %2, %arg2 : i32, i32
  }
  func.func @transform_1(%arg0: i32, %arg1: i32, %arg2: i32) -> (i32, i32) {
    %c1_i32 = arith.constant 1 : i32
    %0 = arith.muli %arg0, %c1_i32 : i32
    %1 = arith.addi %0, %arg1 : i32
    %c0_i32 = arith.constant 0 : i32
    %c0_i32_0 = arith.constant 0 : i32
    return %1, %c0_i32 : i32, i32
  }
  func.func @transform_2(%arg0: i32, %arg1: i32, %arg2: i32) -> (i32, i32, i32) {
    %c0_i32 = arith.constant 0 : i32
    %c0_i32_0 = arith.constant 0 : i32
    %c0_i32_1 = arith.constant 0 : i32
    return %arg0, %c0_i32, %c0_i32_0 : i32, i32, i32
  }
  func.func @transform_3(%arg0: i32, %arg1: i32, %arg2: i32) -> (i32, i32, i32) {
    %c0_i32 = arith.constant 0 : i32
    %c0_i32_0 = arith.constant 0 : i32
    %c0_i32_1 = arith.constant 0 : i32
    return %arg0, %c0_i32, %c0_i32_0 : i32, i32, i32
  }
}

</mosaic_0001>

<llo_original>
// kernel: tpu_custom_call.1
$region0: #{tpu_custom_call.1}
  #allocation0 [shape = 'u32[]', space=smem, size = 0x4, offset = 0x4, fixed_abs, tag = 'smem constant byte address 0x4 - core index']
  #allocation1 [shape = 'u32[144,128]{1,0:T(1,128)}', space=vmem, size = 0x12000, scoped, tag = 'internal scratch']
  %s0 = inlined_call_operand.vmem [shape: f32[16,32], index: 0, kind: input, shape index: {}]
  %s1 = inlined_call_operand.vmem [shape: s32[16,1], index: 1, kind: input, shape index: {}]
  %s2 = inlined_call_operand.hbm [shape: s32[1,8,128], index: 2, kind: output, shape index: {0}]
  %s3 = inlined_call_operand.hbm [shape: s32[1,8,128], index: 3, kind: output, shape index: {1}]
  %4 = xla_tuple %s2, %s3
  %s5 = sld [smem:[#allocation0]]
  $region34: #{tpu_custom_call.1} parent=0
    _
  %s7 = ssub.s32 1, %s5
  %s8 = scalar_select 0, %s7, %s5
  $region1: #{tpu_custom_call.1} parent=0
    #allocation2 [shape = 'u8[4096]{0}', space=vmem, size = 0x1000, scoped, tag = 'output window, operand 0, single buffered']
    #allocation3 [shape = 's32[1]{0}', space=sflag, size = 0x4, scoped, tag = 'scoped memory for tpu_custom_call.1']
    #allocation4 [shape = 'u8[4096]{0}', space=vmem, size = 0x1000, scoped, tag = 'output window, operand 1, single buffered']
    #allocation5 [shape = 's32[1]{0}', space=sflag, size = 0x4, scoped, tag = 'scoped memory for tpu_custom_call.1']
    %9 = vsyncpa [#allocation3], 0
    %10 = vsyncpa [#allocation5], 0
    // Predicated region
    $region2: #{tpu_custom_call.1} parent=1 // pred_check
      _
    $region3: #{tpu_custom_call.1} parent=1 // pred_check_branch
      %12 = sbr.rel (0) target = $region5
    $region4: #{tpu_custom_call.1} parent=1 // pred_region
      %s13 = sadd.s32 0, 0
      %p14 = scmp.lt.s32.totalorder %s13, 0
      %s15 = scalar_select %p14, %s13, 0
      %s16 = smul.u32 2, %s15
      %p17 = scmp.lt.s32.totalorder %s16, 1
      %s18 = scalar_select %p17, %s16, 1
      %s19 = smul.addr %s18, 8
      %s20 = scalar_lea.vmem %s0, %s19
      %s21 = sadd.s32 0, 0
      %p22 = scmp.lt.s32.totalorder %s21, 0
      %s23 = scalar_select %p22, %s21, 0
      %s24 = smul.u32 2, %s23
    $region5: #{tpu_custom_call.1} parent=1 // pred_fallthru
      _
    // Predicated region
    $region6: #{tpu_custom_call.1} parent=1 // pred_check
      _
    $region7: #{tpu_custom_call.1} parent=1 // pred_check_branch
      %26 = sbr.rel (0) target = $region9
    $region8: #{tpu_custom_call.1} parent=1 // pred_region
      %s27 = sadd.s32 0, 0
      %s28 = smul.u32 2, %s27
      %p29 = scmp.lt.s32.totalorder %s28, 1
      %s30 = scalar_select %p29, %s28, 1
      %s31 = smul.addr %s30, 8
      %s32 = scalar_lea.vmem %s1, %s31
      %s33 = sadd.s32 0, 0
      %s34 = smul.u32 2, %s33
    $region9: #{tpu_custom_call.1} parent=1 // pred_fallthru
      _
    %s35 = sadd.s32 0, 0
    %p36 = scmp.lt.s32.totalorder %s35, 0
    %s37 = scalar_select %p36, %s35, 0
    %s38 = smul.u32 2, %s37
    %p39 = scmp.lt.s32.totalorder %s38, 1
    %s40 = scalar_select %p39, %s38, 1
    %s41 = smul.addr %s40, 8
    %s42 = scalar_lea.vmem %s0, %s41
    %s43 = sadd.s32 0, 0
    %s44 = smul.u32 2, %s43
    %p45 = scmp.lt.s32.totalorder %s44, 1
    %s46 = scalar_select %p45, %s44, 1
    %s47 = smul.addr %s46, 8
    %s48 = scalar_lea.vmem %s1, %s47
    %s49 = sadd.s32 0, 0
    %p50 = scmp.lt.s32.totalorder %s49, 0
    %s51 = scalar_select %p50, %s49, 0
    %s52 = smul.u32 2, %s51
    %p53 = scmp.lt.s32.totalorder %s52, 1
    %s54 = scalar_select %p53, %s52, 1
    %s55 = smul.addr %s54, 8
    %s56 = scalar_lea.vmem %s0, %s55
    %s57 = sadd.s32 0, 0
    %p58 = scmp.lt.s32.totalorder %s57, 0
    %s59 = scalar_select %p58, %s57, 0
    %s60 = smul.u32 2, %s59
    %s61 = sadd.s32 0, 0
    %s62 = smul.u32 2, %s61
    %p63 = scmp.lt.s32.totalorder %s62, 1
    %s64 = scalar_select %p63, %s62, 1
    %s65 = smul.addr %s64, 8
    %s66 = scalar_lea.vmem %s1, %s65
    %s67 = sadd.s32 0, 0
    %s68 = smul.u32 2, %s67
    %p69 = scmp.eq.s32.totalorder 0, 0
    %p70 = scmp.eq.s32.totalorder 0, 0
    %p71 = pnand %p69, %p70
    %p72 = pneg %p71
    // Predicated region
    $region10: #{tpu_custom_call.1} parent=1 // pred_check
      _
    $region11: #{tpu_custom_call.1} parent=1 // pred_check_branch
      %74 = sbr.rel (%p71) target = $region13
    $region12: #{tpu_custom_call.1} parent=1 // pred_region
      %75 = vst [vmem:[#allocation2] sm:$0xff] 0
      %76 = vst [vmem:[#allocation4] sm:$0xff] 0
    $region13: #{tpu_custom_call.1} parent=1 // pred_fallthru
      _
    %v77 = vld [vmem:[%s56] sm:$0xff]
    %v78 = vld [vmem:[%s56 + $0x8] sm:$0xff]
    %v79 = vlaneseq
    %v80 = vand.u32 %v79, 127
    %vm81 = vcmask 261120
    %v82 = vsel %vm81, %v77, -inf
    %83 = vmax.xlane.f32.xlu0 %v82
    %v84 = vpop.xlane.xlu0 %83
    %v85 = vsel %vm81, %v78, -inf
    %86 = vmax.xlane.f32.xlu0 %v85
    %v87 = vpop.xlane.xlu0 %86
    %vm88 = vcmp.eq.f32.partialorder %v77, %v84
    %vm89 = vcmp.eq.f32.partialorder %v78, %v87
    %v90 = vsel %vm88, %v80, 32
    %v91 = vsel %vm89, %v80, 32
    %v92 = vsel %vm81, %v90, 2147483647
    %v93 = vand.u32 %v92, 65535
    %v94 = vshra.s32 %v92, 16
    %v95 = vcvt.s32.f32 %v93
    %v96 = vcvt.s32.f32 %v94
    %97 = vmin.xlane.f32.xlu0 %v96
    %v98 = vpop.xlane.xlu0 %97
    %vm99 = vcmp.eq.f32.partialorder %v96, %v98
    %v100 = vsel %vm99, %v95, inf
    %101 = vmin.xlane.f32.xlu0 %v100
    %v102 = vpop.xlane.xlu0 %101
    %v103 = vcvt.f32.s32 %v102
    %v104 = vcvt.f32.s32 %v98
    %v105 = vshll.u32 %v104, 16
    %v106 = vadd.s32 %v105, %v103
    %v107 = vsel %vm81, %v91, 2147483647
    %v108 = vand.u32 %v107, 65535
    %v109 = vshra.s32 %v107, 16
    %v110 = vcvt.s32.f32 %v108
    %v111 = vcvt.s32.f32 %v109
    %112 = vmin.xlane.f32.xlu0 %v111
    %v113 = vpop.xlane.xlu0 %112
    %vm114 = vcmp.eq.f32.partialorder %v111, %v113
    %v115 = vsel %vm114, %v110, inf
    %116 = vmin.xlane.f32.xlu0 %v115
    %v117 = vpop.xlane.xlu0 %116
    %v118 = vcvt.f32.s32 %v117
    %v119 = vcvt.f32.s32 %v113
    %v120 = vshll.u32 %v119, 16
    %v121 = vadd.s32 %v120, %v118
    // Predicated region
    $region14: #{tpu_custom_call.1} parent=1 // pred_check
      %p122 = pneg %p70
    $region15: #{tpu_custom_call.1} parent=1 // pred_check_branch
      %124 = sbr.rel (%p122) target = $region17
    $region16: #{tpu_custom_call.1} parent=1 // pred_region
      %v125 = vld [vmem:[%s66] sm:$0xff]
      %v126 = vld [vmem:[%s66 + $0x8] sm:$0xff]
      %vm127 = vcmp.ne.s32.totalorder %v125, 4294967295
      %vm128 = vcmp.ne.s32.totalorder %v126, 4294967295
      %vm129 = vcmp.eq.s32.totalorder %v106, %v125
      %vm130 = vcmp.eq.s32.totalorder %v121, %v126
      %vm131 = vmand %vm129, %vm127
      %vm132 = vmand %vm130, %vm128
      %v133 = vld [vmem:[#allocation2] sm:$0xff]
      %v134 = vsel %vm131, 1, 0
      %v135 = vsel %vm132, 1, 0
      %vm136 = vcmask 7168
      %v137 = vsel %vm136, %v134, 0
      %v138 = vsel %vm136, %v135, 0
      %v139 = vadd.s32 %v137, %v138
      %v140 = vand.u32 %v139, 65535
      %v141 = vshrl.u32 %v139, 16
      %v142 = vcvt.s32.f32 %v140
      %v143 = vcvt.s32.f32 %v141
      %144 = vadd.xlane.f32.xlu0 %v142
      %v145 = vpop.xlane.xlu0 %144
      %146 = vadd.xlane.f32.xlu0 %v143
      %v147 = vpop.xlane.xlu0 %146
      %v148 = vcvt.f32.s32 %v145
      %v149 = vcvt.f32.s32 %v147
      %v150 = vshll.u32 %v149, 16
      %v151 = vadd.s32 %v150, %v148
      %v152 = vrot.slane %v151, 4
      %v153 = vadd.s32 %v151, %v152
      %v154 = vrot.slane %v153, 2
      %v155 = vadd.s32 %v153, %v154
      %v156 = vrot.slane %v155, 1
      %v157 = vadd.s32 %v155, %v156
      %s158 = vtos %v157
      %v159 = vstv %s158
      %v160 = vadd.s32 %v133, %v159
      %161 = vst [vmem:[#allocation2] sm:$0xff] %v160
      %v162 = vld [vmem:[#allocation4] sm:$0xff]
      %v163 = vsel %vm127, 1, 0
      %v164 = vsel %vm128, 1, 0
      %v165 = vsel %vm136, %v163, 0
      %v166 = vsel %vm136, %v164, 0
      %v167 = vadd.s32 %v165, %v166
      %v168 = vand.u32 %v167, 65535
      %v169 = vshrl.u32 %v167, 16
      %v170 = vcvt.s32.f32 %v168
      %v171 = vcvt.s32.f32 %v169
      %172 = vadd.xlane.f32.xlu0 %v170
      %v173 = vpop.xlane.xlu0 %172
      %174 = vadd.xlane.f32.xlu0 %v171
      %v175 = vpop.xlane.xlu0 %174
      %v176 = vcvt.f32.s32 %v173
      %v177 = vcvt.f32.s32 %v175
      %v178 = vshll.u32 %v177, 16
      %v179 = vadd.s32 %v178, %v176
      %v180 = vrot.slane %v179, 4
      %v181 = vadd.s32 %v179, %v180
      %v182 = vrot.slane %v181, 2
      %v183 = vadd.s32 %v181, %v182
      %v184 = vrot.slane %v183, 1
      %v185 = vadd.s32 %v183, %v184
      %s186 = vtos %v185
      %v187 = vstv %s186
      %v188 = vadd.s32 %v162, %v187
      %189 = vst [vmem:[#allocation4] sm:$0xff] %v188
    $region17: #{tpu_custom_call.1} parent=1 // pred_fallthru
      _
    // Predicated region
    $region18: #{tpu_custom_call.1} parent=1 // pred_check
      _
    $region19: #{tpu_custom_call.1} parent=1 // pred_check_branch
      %191 = sbr.rel (0) target = $region21
    $region20: #{tpu_custom_call.1} parent=1 // pred_region
      %s193 = ssub.s32 128, 128
      %194 = vsyncadd [#allocation3], %s193
      %s196 = sshll.u32 [#allocation2], 4
      %s197 = int_to_ptr.vmem [resolvable:$true] %s196
      %199 = dma.vmem_to_hbm [thread:$0]  %s197, 128, %s2, [#allocation3]
    $region21: #{tpu_custom_call.1} parent=1 // pred_fallthru
      _
    // Predicated region
    $region22: #{tpu_custom_call.1} parent=1 // pred_check
      _
    $region23: #{tpu_custom_call.1} parent=1 // pred_check_branch
      %201 = sbr.rel (0) target = $region25
    $region24: #{tpu_custom_call.1} parent=1 // pred_region
      %s203 = ssub.s32 128, 128
      %204 = vsyncadd [#allocation5], %s203
      %s206 = sshll.u32 [#allocation4], 4
      %s207 = int_to_ptr.vmem [resolvable:$true] %s206
      %209 = dma.vmem_to_hbm [thread:$0]  %s207, 128, %s3, [#allocation5]
    $region25: #{tpu_custom_call.1} parent=1 // pred_fallthru
      _
    // Predicated region
    $region26: #{tpu_custom_call.1} parent=1 // pred_check
      _
    $region27: #{tpu_custom_call.1} parent=1 // pred_check_branch
      %211 = sbr.rel (0) target = $region29
    $region28: #{tpu_custom_call.1} parent=1 // pred_region
      %212 = dma.done [#allocation3], 128
    $region29: #{tpu_custom_call.1} parent=1 // pred_fallthru
      _
    // Predicated region
    $region30: #{tpu_custom_call.1} parent=1 // pred_check
      _
    $region31: #{tpu_custom_call.1} parent=1 // pred_check_branch
      %214 = sbr.rel (0) target = $region33
    $region32: #{tpu_custom_call.1} parent=1 // pred_region
      %215 = dma.done [#allocation5], 128
    $region33: #{tpu_custom_call.1} parent=1 // pred_fallthru
      _
    %216 = vsyncpa [#allocation3], 1
    %217 = vsyncpa [#allocation5], 1

</llo_original>
